<compile_context>
chip_gen: v7x
topology: tpu7x:2x2x1
jax: 0.10.0
libtpu: 0.0.40
codegen_flags: <defaults>
</compile_context>

<pallas_src>
import functools

import jax
import jax.numpy as jnp
from jax.experimental import pallas as pl
from jax.experimental.pallas import tpu as pltpu


def _oe_loss_kernel(x_ref, p_ref, *, total_rows, tm, need_mask):
    """One (tm, C) row tile -> one (8, 128) block holding its scalar partial."""
    x = x_ref[...].astype(jnp.float32)            # (tm, C), compute in f32
    c = x.shape[1]

    if need_mask:
        i = pl.program_id(0)
        row_ids = i * tm + jax.lax.broadcasted_iota(jnp.int32, (tm, 1), 0)
        valid = row_ids < total_rows
        x = jnp.where(valid, x, 0.0)              # zero padded / invalid rows

    # numerically stable per-row logsumexp (max + sum-exp lane reductions)
    m = jnp.max(x, axis=1, keepdims=True)                      # (tm, 1)
    s = jnp.sum(jnp.exp(x - m), axis=1, keepdims=True)         # (tm, 1)
    lse = m + jnp.log(s)                                       # (tm, 1)
    if need_mask:
        lse = jnp.where(valid, lse, 0.0)

    # sum over this tile's rows of (row_mean - lse); mean folded to a grand sum
    partial = jnp.sum(x) * jnp.float32(1.0 / c) - jnp.sum(lse)

    # lane-dense, (8,128)-aligned store of the (broadcast) scalar partial
    p_ref[...] = jnp.broadcast_to(partial, (8, 128)).astype(jnp.float32)


def _pick_tm(n_rows, n_cols, itemsize, target_block_bytes=2 << 20, max_tm=2048):
    """Row tile: big enough to amortize per-step overhead, multiple of 8."""
    tm = target_block_bytes // max(1, n_cols * itemsize)
    tm = max(8, min(max_tm, int(tm)))
    tm -= tm % 8
    n_pad = ((n_rows + 7) // 8) * 8                # don't exceed padded N
    return max(8, min(tm, n_pad))


def oe_loss(x, *, tm=None):
    """x: (N, C) float array (f32 / bf16 / ...). Returns scalar float32 loss."""
    N, C = x.shape
    itemsize = jnp.dtype(x.dtype).itemsize
    if tm is None:
        tm = _pick_tm(N, C, itemsize)
    tm = max(8, tm - tm % 8)
    grid = pl.cdiv(N, tm)
    need_mask = (N % tm) != 0

    kernel = functools.partial(
        _oe_loss_kernel, total_rows=N, tm=tm, need_mask=need_mask)

    # input is double-buffered; leave room for the f32 working copy + temps.
    in_block_bytes = tm * C * itemsize
    f32_block_bytes = tm * C * 4
    vmem_limit = int(min(64 * 1024 * 1024,
                         max(32 * 1024 * 1024,
                             2 * in_block_bytes + 6 * f32_block_bytes)))

    partials = pl.pallas_call(
        kernel,
        out_shape=jax.ShapeDtypeStruct((grid * 8, 128), jnp.float32),
        grid_spec=pltpu.PrefetchScalarGridSpec(
            num_scalar_prefetch=0,
            grid=(grid,),
            in_specs=[pl.BlockSpec((tm, C), lambda i: (i, 0))],
            out_specs=pl.BlockSpec((8, 128), lambda i: (i, 0)),
        ),
        compiler_params=pltpu.CompilerParams(
            dimension_semantics=("parallel",),      # row tiles are independent
            vmem_limit_bytes=vmem_limit,
        ),
    )(x)

    # each (8,128) block is a broadcast of one scalar partial -> take element 0
    per_tile = partials.reshape(grid, 8 * 128)[:, 0]
    return -(jnp.sum(per_tile) / jnp.float32(N))


def oe_loss_ref(x):
    xf = x.astype(jnp.float32)
    return -(jnp.mean(xf, axis=1) - jax.scipy.special.logsumexp(xf, axis=1)).mean()


if __name__ == "__main__":
    key = jax.random.PRNGKey(0)
    k0, k1, k2, k3 = jax.random.split(key, 4)

    # small (N, C) logits batches, consistent with the module's forward
    cases = [
        ("f32_aligned",
         jax.random.normal(k0, (64, 128), dtype=jnp.float32) * 3.0, None),
        ("f32_remainder",
         jax.random.normal(k1, (200, 384), dtype=jnp.float32) * 2.0, 64),
        ("f32_small_C",
         jax.random.normal(k2, (24, 10), dtype=jnp.float32) * 4.0, None),
        ("bf16_input",
         (jax.random.normal(k3, (128, 256), dtype=jnp.float32) * 3.0
          ).astype(jnp.bfloat16), None),
    ]

    for name, xc, tm_override in cases:
        got = jax.block_until_ready(oe_loss(xc, tm=tm_override))
        want = jax.block_until_ready(oe_loss_ref(xc))
        assert jnp.allclose(got, want, atol=1e-4, rtol=1e-5), (name, got, want)

    print("KERNEL_OK")
</pallas_src>

<mosaic_0001>
module attributes {stable_mosaic.version = 11 : i64} {
  func.func @_oe_loss_kernel(%arg0: i32, %arg1: memref<64x128xf32, #tpu.memory_space<vmem>>, %arg2: memref<8x128xf32, #tpu.memory_space<vmem>>) attributes {dimension_semantics = [#tpu.dimension_semantics<parallel>], iteration_bounds = array<i64: 1>, scalar_prefetch = 0 : i64, scratch_operands = 0 : i64, tpu.core_type = #tpu.core_type<tc>, window_params = [{transform_indices = @transform_0, window_bounds = array<i64: 64, 128>}, {transform_indices = @transform_1, window_bounds = array<i64: 8, 128>}]} {
    %c0 = arith.constant 0 : index
    %c0_0 = arith.constant 0 : index
    %0 = vector.load %arg1[%c0, %c0_0] : memref<64x128xf32, #tpu.memory_space<vmem>>, vector<64x128xf32>
    %cst = arith.constant dense<0xFF800000> : vector<64xf32>
    %1 = vector.multi_reduction <maximumf>, %0, %cst [1] : vector<64x128xf32> to vector<64xf32>
    %2 = vector.shape_cast %1 : vector<64xf32> to vector<64x1xf32>
    %3 = vector.broadcast %2 : vector<64x1xf32> to vector<64x128xf32>
    %4 = arith.subf %0, %3 : vector<64x128xf32>
    %5 = math.exp %4 : vector<64x128xf32>
    %cst_1 = arith.constant dense<0.000000e+00> : vector<64xf32>
    %6 = vector.multi_reduction <add>, %5, %cst_1 [1] : vector<64x128xf32> to vector<64xf32>
    %7 = vector.shape_cast %6 : vector<64xf32> to vector<64x1xf32>
    %8 = math.log %7 : vector<64x1xf32>
    %9 = arith.addf %2, %8 : vector<64x1xf32>
    %10 = vector.shape_cast %0 : vector<64x128xf32> to vector<1x64x128xf32>
    %cst_2 = arith.constant dense<0.000000e+00> : vector<1xf32>
    %11 = vector.multi_reduction <add>, %10, %cst_2 [1, 2] : vector<1x64x128xf32> to vector<1xf32>
    %12 = vector.shape_cast %11 : vector<1xf32> to vector<1x1x1xf32>
    %13 = vector.extract %12[0, 0, 0] : f32 from vector<1x1x1xf32>
    %cst_3 = arith.constant 7.812500e-03 : f32
    %14 = arith.mulf %13, %cst_3 : f32
    %15 = vector.shape_cast %9 : vector<64x1xf32> to vector<1x64x1xf32>
    %cst_4 = arith.constant dense<0.000000e+00> : vector<1xf32>
    %16 = vector.multi_reduction <add>, %15, %cst_4 [1, 2] : vector<1x64x1xf32> to vector<1xf32>
    %17 = vector.shape_cast %16 : vector<1xf32> to vector<1x1x1xf32>
    %18 = vector.extract %17[0, 0, 0] : f32 from vector<1x1x1xf32>
    %19 = arith.subf %14, %18 : f32
    %20 = vector.broadcast %19 : f32 to vector<8x128xf32>
    %c0_5 = arith.constant 0 : index
    %c0_6 = arith.constant 0 : index
    %21 = vector.load %arg2[%c0_5, %c0_6] : memref<8x128xf32, #tpu.memory_space<vmem>>, vector<8x128xf32>
    tpu.vector_store %arg2[%c0_5, %c0_6], %20 {strides = array<i32>} : memref<8x128xf32, #tpu.memory_space<vmem>>, vector<8x128xf32>,
    return
  }
  func.func @transform_0(%arg0: i32) -> (i32, i32) {
    %c0_i32 = arith.constant 0 : i32
    %c0_i32_0 = arith.constant 0 : i32
    return %arg0, %c0_i32 : i32, i32
  }
  func.func @transform_1(%arg0: i32) -> (i32, i32) {
    %c0_i32 = arith.constant 0 : i32
    %c0_i32_0 = arith.constant 0 : i32
    return %arg0, %c0_i32 : i32, i32
  }
}

</mosaic_0001>

<llo_original>
// kernel: tpu_custom_call.1
$region0: #{tpu_custom_call.1}
  #allocation0 [shape = 'u32[]', space=smem, size = 0x4, offset = 0x4, fixed_abs, tag = 'smem constant byte address 0x4 - core index']
  #allocation1 [shape = 'u32[144,128]{1,0:T(1,128)}', space=vmem, size = 0x12000, scoped, tag = 'internal scratch']
  %s0 = inlined_call_operand.hbm [shape: f32[64,128], index: 0, kind: input, shape index: {}]
  %s1 = inlined_call_operand.hbm [shape: f32[8,128], index: 1, kind: output, shape index: {}]
  %s2 = sld [smem:[#allocation0]]
  $region18: #{tpu_custom_call.1} parent=0
    _
  %s4 = ssub.s32 1, %s2
  %s5 = scalar_select 0, %s4, %s2
  $region1: #{tpu_custom_call.1} parent=0
    #allocation2 [shape = 'u8[32768]{0}', space=vmem, size = 0x8000, scoped, tag = 'input window, operand 0, single buffered']
    #allocation3 [shape = 's32[1]{0}', space=sflag, size = 0x4, scoped, tag = 'scoped memory for tpu_custom_call.1']
    #allocation4 [shape = 's32[1]{0}', space=sflag, size = 0x4, scoped, tag = 'scoped memory for tpu_custom_call.1']
    #allocation5 [shape = 'u8[4096]{0}', space=vmem, size = 0x1000, scoped, tag = 'output window, operand 0, single buffered']
    %6 = vsyncpa [#allocation3], 0
    %7 = vsyncpa [#allocation4], 0
    // Predicated region
    $region2: #{tpu_custom_call.1} parent=1 // pred_check
      _
    $region3: #{tpu_custom_call.1} parent=1 // pred_check_branch
      %9 = sbr.rel (0) target = $region5
    $region4: #{tpu_custom_call.1} parent=1 // pred_region
      %s11 = ssub.s32 1024, 1024
      %12 = vsyncadd [#allocation3], %s11
      %s13 = sshll.u32 [#allocation2], 4
      %s14 = int_to_ptr.vmem [resolvable:$true] %s13
      %19 = dma.hbm_to_vmem [thread:$0]  %s0, 1024, %s14, [#allocation3], 128, 128, 8
    $region5: #{tpu_custom_call.1} parent=1 // pred_fallthru
      _
    // Predicated region
    $region6: #{tpu_custom_call.1} parent=1 // pred_check
      _
    $region7: #{tpu_custom_call.1} parent=1 // pred_check_branch
      %21 = sbr.rel (0) target = $region9
    $region8: #{tpu_custom_call.1} parent=1 // pred_region
      %22 = dma.done [#allocation3], 1024
    $region9: #{tpu_custom_call.1} parent=1 // pred_fallthru
      _
    %v23 = vld [vmem:[#allocation2] sm:$0xff]
    %v24 = vld [vmem:[#allocation2 + $0x8] sm:$0xff]
    %v25 = vld [vmem:[#allocation2 + $0x10] sm:$0xff]
    %v26 = vld [vmem:[#allocation2 + $0x18] sm:$0xff]
    %v27 = vld [vmem:[#allocation2 + $0x20] sm:$0xff]
    %v28 = vld [vmem:[#allocation2 + $0x28] sm:$0xff]
    %v29 = vld [vmem:[#allocation2 + $0x30] sm:$0xff]
    %v30 = vld [vmem:[#allocation2 + $0x38] sm:$0xff]
    %31 = vmax.xlane.f32.xlu0 %v23
    %v32 = vpop.xlane.xlu0 %31
    %33 = vmax.xlane.f32.xlu0 %v24
    %v34 = vpop.xlane.xlu0 %33
    %35 = vmax.xlane.f32.xlu0 %v25
    %v36 = vpop.xlane.xlu0 %35
    %37 = vmax.xlane.f32.xlu0 %v26
    %v38 = vpop.xlane.xlu0 %37
    %39 = vmax.xlane.f32.xlu0 %v27
    %v40 = vpop.xlane.xlu0 %39
    %41 = vmax.xlane.f32.xlu0 %v28
    %v42 = vpop.xlane.xlu0 %41
    %43 = vmax.xlane.f32.xlu0 %v29
    %v44 = vpop.xlane.xlu0 %43
    %45 = vmax.xlane.f32.xlu0 %v30
    %v46 = vpop.xlane.xlu0 %45
    %v47 = vsub.f32 %v23, %v32
    %v48 = vsub.f32 %v24, %v34
    %v49 = vsub.f32 %v25, %v36
    %v50 = vsub.f32 %v26, %v38
    %v51 = vsub.f32 %v27, %v40
    %v52 = vsub.f32 %v28, %v42
    %v53 = vsub.f32 %v29, %v44
    %v54 = vsub.f32 %v30, %v46
    %v55 = vmul.f32 %v47, 1.442695
    %v56 = vpow.pop %v55
    %v57 = vmul.f32 %v48, 1.442695
    %v58 = vpow.pop %v57
    %v59 = vmul.f32 %v49, 1.442695
    %v60 = vpow.pop %v59
    %v61 = vmul.f32 %v50, 1.442695
    %v62 = vpow.pop %v61
    %v63 = vmul.f32 %v51, 1.442695
    %v64 = vpow.pop %v63
    %v65 = vmul.f32 %v52, 1.442695
    %v66 = vpow.pop %v65
    %v67 = vmul.f32 %v53, 1.442695
    %v68 = vpow.pop %v67
    %v69 = vmul.f32 %v54, 1.442695
    %v70 = vpow.pop %v69
    %71 = vadd.xlane.f32.xlu0 %v56
    %v72 = vpop.xlane.xlu0 %71
    %73 = vadd.xlane.f32.xlu0 %v58
    %v74 = vpop.xlane.xlu0 %73
    %75 = vadd.xlane.f32.xlu0 %v60
    %v76 = vpop.xlane.xlu0 %75
    %77 = vadd.xlane.f32.xlu0 %v62
    %v78 = vpop.xlane.xlu0 %77
    %79 = vadd.xlane.f32.xlu0 %v64
    %v80 = vpop.xlane.xlu0 %79
    %81 = vadd.xlane.f32.xlu0 %v66
    %v82 = vpop.xlane.xlu0 %81
    %83 = vadd.xlane.f32.xlu0 %v68
    %v84 = vpop.xlane.xlu0 %83
    %85 = vadd.xlane.f32.xlu0 %v70
    %v86 = vpop.xlane.xlu0 %85
    %v87 = vlog2.pop %v72
    %v88 = vmul.f32 %v87, 0.6931472
    %v89 = vlog2.pop %v74
    %v90 = vmul.f32 %v89, 0.6931472
    %v91 = vlog2.pop %v76
    %v92 = vmul.f32 %v91, 0.6931472
    %v93 = vlog2.pop %v78
    %v94 = vmul.f32 %v93, 0.6931472
    %v95 = vlog2.pop %v80
    %v96 = vmul.f32 %v95, 0.6931472
    %v97 = vlog2.pop %v82
    %v98 = vmul.f32 %v97, 0.6931472
    %v99 = vlog2.pop %v84
    %v100 = vmul.f32 %v99, 0.6931472
    %v101 = vlog2.pop %v86
    %v102 = vmul.f32 %v101, 0.6931472
    %v103 = vadd.f32 %v32, %v88
    %v104 = vadd.f32 %v34, %v90
    %v105 = vadd.f32 %v36, %v92
    %v106 = vadd.f32 %v38, %v94
    %v107 = vadd.f32 %v40, %v96
    %v108 = vadd.f32 %v42, %v98
    %v109 = vadd.f32 %v44, %v100
    %v110 = vadd.f32 %v46, %v102
    %v111 = vadd.f32 %v23, %v24
    %v112 = vadd.f32 %v111, %v25
    %v113 = vadd.f32 %v112, %v26
    %v114 = vadd.f32 %v113, %v27
    %v115 = vadd.f32 %v114, %v28
    %v116 = vadd.f32 %v115, %v29
    %v117 = vadd.f32 %v116, %v30
    %118 = vadd.xlane.f32.xlu0 %v117
    %v119 = vpop.xlane.xlu0 %118
    %v120 = vrot.slane %v119, 4
    %v121 = vadd.f32 %v119, %v120
    %v122 = vrot.slane %v121, 2
    %v123 = vadd.f32 %v121, %v122
    %v124 = vrot.slane %v123, 1
    %v125 = vadd.f32 %v123, %v124
    %s126 = vtos %v125
    %s127 = smul.f32 %s126, 0.0078125
    %vm128 = vcmask 7168
    %v129 = vsel %vm128, %v103, 0.0
    %v130 = vsel %vm128, %v104, 0.0
    %v131 = vadd.f32 %v129, %v130
    %v132 = vsel %vm128, %v105, 0.0
    %v133 = vadd.f32 %v131, %v132
    %v134 = vsel %vm128, %v106, 0.0
    %v135 = vadd.f32 %v133, %v134
    %v136 = vsel %vm128, %v107, 0.0
    %v137 = vadd.f32 %v135, %v136
    %v138 = vsel %vm128, %v108, 0.0
    %v139 = vadd.f32 %v137, %v138
    %v140 = vsel %vm128, %v109, 0.0
    %v141 = vadd.f32 %v139, %v140
    %v142 = vsel %vm128, %v110, 0.0
    %v143 = vadd.f32 %v141, %v142
    %144 = vadd.xlane.f32.xlu0 %v143
    %v145 = vpop.xlane.xlu0 %144
    %v146 = vrot.slane %v145, 4
    %v147 = vadd.f32 %v145, %v146
    %v148 = vrot.slane %v147, 2
    %v149 = vadd.f32 %v147, %v148
    %v150 = vrot.slane %v149, 1
    %v151 = vadd.f32 %v149, %v150
    %s152 = vtos %v151
    %s153 = ssub.f32 %s127, %s152
    %v154 = vstv %s153
    %155 = vst [vmem:[#allocation5] sm:$0xff] %v154
    // Predicated region
    $region10: #{tpu_custom_call.1} parent=1 // pred_check
      _
    $region11: #{tpu_custom_call.1} parent=1 // pred_check_branch
      %157 = sbr.rel (0) target = $region13
    $region12: #{tpu_custom_call.1} parent=1 // pred_region
      %s159 = ssub.s32 128, 128
      %160 = vsyncadd [#allocation4], %s159
      %s162 = sshll.u32 [#allocation5], 4
      %s163 = int_to_ptr.vmem [resolvable:$true] %s162
      %165 = dma.vmem_to_hbm [thread:$0]  %s163, 128, %s1, [#allocation4]
    $region13: #{tpu_custom_call.1} parent=1 // pred_fallthru
      _
    // Predicated region
    $region14: #{tpu_custom_call.1} parent=1 // pred_check
      _
    $region15: #{tpu_custom_call.1} parent=1 // pred_check_branch
      %167 = sbr.rel (0) target = $region17
    $region16: #{tpu_custom_call.1} parent=1 // pred_region
      %168 = dma.done [#allocation4], 128
    $region17: #{tpu_custom_call.1} parent=1 // pred_fallthru
      _
    %169 = vsyncpa [#allocation3], 1
    %170 = vsyncpa [#allocation4], 1

</llo_original>
